<compile_context>
chip_gen: v5e
topology: v5e:2x2
jax: 0.10.0
libtpu: 0.0.40
codegen_flags: <defaults>
</compile_context>

<pallas_src>
import functools
import math

import numpy as np

import jax
import jax.numpy as jnp
from jax.experimental import pallas as pl
from jax.experimental.pallas import tpu as pltpu


def _densenorm_direct_kernel(x_ref, o_ref, *, inv_d, eps):
    """Block = (tile_rows, d); reduce over the whole last axis of the block."""
    xf = x_ref[...].astype(jnp.float32)
    ms = jnp.sum(xf * xf, axis=-1, keepdims=True) * inv_d        # (T, 1)
    inv = jax.lax.rsqrt(ms + eps)
    o_ref[...] = (x_ref[...].astype(jnp.float32) * inv).astype(o_ref.dtype)


def _densenorm_folded_kernel(x_ref, e_ref, o_ref, *, inv_d, eps):
    """Block = (tile_rows, n) where each row holds n//d independent length-d segments.

    e_ref is a VMEM-resident bf16 0/1 selector with E[i, j] = 1 iff lanes i and j
    belong to the same segment, so xx @ E yields, for every lane, the sum of x^2
    over its own segment (reduce + broadcast in one pass).  0/1 is exact in bf16;
    the hi/lo split of x^2 keeps the sum at ~f32 accuracy.
    """
    xf = x_ref[...].astype(jnp.float32)
    xx = xf * xf
    xx_hi = xx.astype(jnp.bfloat16)
    xx_lo = (xx - xx_hi.astype(jnp.float32)).astype(jnp.bfloat16)
    e = e_ref[...]
    ssum = (jnp.dot(xx_hi, e, preferred_element_type=jnp.float32)
            + jnp.dot(xx_lo, e, preferred_element_type=jnp.float32))  # (T, n)
    inv = jax.lax.rsqrt(ssum * inv_d + eps)                           # (T, n)
    o_ref[...] = (x_ref[...].astype(jnp.float32) * inv).astype(o_ref.dtype)


def dense_norm(x, eps=1e-6):
    """DenseNorm forward: normalize over the last axis of `x` (any rank)."""
    orig_shape = x.shape
    orig_dtype = x.dtype
    if x.size == 0:
        return x

    d = int(orig_shape[-1])
    rows = 1
    for s in orig_shape[:-1]:
        rows *= int(s)

    # ---- lane-dense folding for small reduced dims (unmasked DMA / stores) ----
    fold = 1
    if d < 128:
        base_k = 128 // math.gcd(d, 128)        # smallest k with (k*d) % 128 == 0
        n_try = base_k * d
        if rows >= base_k and n_try <= 512:     # keep the (n,n) selector tiny
            fold = base_k

    x2d = x.reshape(rows, d)
    pad_rows = (-rows) % fold
    if pad_rows:
        # Awkward row counts: pad with zero rows (they normalize to 0 and are
        # sliced off below) instead of dropping back to masked d<128 stores.
        x2d = jnp.pad(x2d, ((0, pad_rows), (0, 0)))
    rows_p = rows + pad_rows
    n_lanes = fold * d
    R = rows_p // fold
    x2 = x2d.reshape(R, n_lanes)                # contiguous reshape

    # ---- per-generation block budget + row tiling ----
    itemsize = jnp.dtype(orig_dtype).itemsize
    row_align = 8 if itemsize >= 4 else (16 if itemsize == 2 else 32)
    try:
        vmem_cap = int(pltpu.get_tpu_info().vmem_capacity_bytes)
    except Exception:
        vmem_cap = 64 * 1024 * 1024             # v7x-safe assumption
    if vmem_cap >= 96 * 1024 * 1024:            # v5e / v6e (128 MiB VMEM)
        block_budget = 12 * 1024 * 1024
    else:                                       # v7x (64 MiB VMEM)
        block_budget = 6 * 1024 * 1024

    # Budget counted in f32 bytes since the in-kernel temporaries are f32.
    row_f32_bytes = n_lanes * 4
    max_tile = max(row_align, (block_budget // row_f32_bytes) // row_align * row_align)
    # TODO(synk): extremely wide rows (row_align * row_f32_bytes >> VMEM) need a
    # lane-split grid with an accumulation pass; not implemented here.

    if R <= row_align:
        tile_rows = R                           # single block == full extent (legal)
    else:
        tile_rows = min(max_tile, R)            # full-extent block is legal if R < max_tile
        # Ensure >= 4 grid steps when rows allow it (pipelining + both v7x TCs busy).
        if pl.cdiv(R, tile_rows) < 4 and R >= 4 * row_align:
            tile_rows = max(row_align, (R // 4) // row_align * row_align)
    grid = (pl.cdiv(R, tile_rows),)             # tail block (if any) is masked by Pallas

    block_f32_bytes = tile_rows * row_f32_bytes
    vmem_limit = 8 * block_f32_bytes + (16 << 20)   # 2x(in)+2x(out) buffers + f32 temps
    vmem_limit = int(max(32 << 20, min(vmem_limit, int(vmem_cap * 0.9))))

    compiler_params = pltpu.CompilerParams(
        dimension_semantics=("parallel",),
        vmem_limit_bytes=vmem_limit,
    )
    out_shape = jax.ShapeDtypeStruct((R, n_lanes), orig_dtype)
    x_spec = pl.BlockSpec((tile_rows, n_lanes), lambda i: (i, 0))
    o_spec = pl.BlockSpec((tile_rows, n_lanes), lambda i: (i, 0))

    if fold == 1:
        kernel = functools.partial(_densenorm_direct_kernel,
                                   inv_d=1.0 / d, eps=float(eps))
        out2 = pl.pallas_call(
            kernel,
            out_shape=out_shape,
            grid_spec=pltpu.PrefetchScalarGridSpec(
                num_scalar_prefetch=0,
                grid=grid,
                in_specs=[x_spec],
                out_specs=o_spec,
            ),
            compiler_params=compiler_params,
        )(x2)
    else:
        # Hoisted selector: built once here, VMEM-resident across the grid via a
        # constant index_map (Pallas does not re-DMA an unchanged block index).
        lane_seg = np.arange(n_lanes) // d
        e_full = jnp.asarray(lane_seg[:, None] == lane_seg[None, :],
                             dtype=jnp.bfloat16)                 # (n, n), 0/1 exact
        kernel = functools.partial(_densenorm_folded_kernel,
                                   inv_d=1.0 / d, eps=float(eps))
        out2 = pl.pallas_call(
            kernel,
            out_shape=out_shape,
            grid_spec=pltpu.PrefetchScalarGridSpec(
                num_scalar_prefetch=0,
                grid=grid,
                in_specs=[x_spec,
                          pl.BlockSpec((n_lanes, n_lanes), lambda i: (0, 0))],
                out_specs=o_spec,
            ),
            compiler_params=compiler_params,
        )(x2, e_full)

    out = out2.reshape(rows_p, d)
    if pad_rows:
        out = out[:rows]
    return out.reshape(orig_shape)


if __name__ == "__main__":
    key = jax.random.PRNGKey(0)
    k1, k2 = jax.random.split(key)

    # NCHW input (small): batch=2, channels=4, spatial=16x16 -> reduced dim W=16
    x = jax.random.normal(k1, (2, 4, 16, 16), dtype=jnp.float32)
    y = jax.block_until_ready(dense_norm(x, eps=1e-6))
    ref = x * jax.lax.rsqrt(jnp.mean(x * x, axis=-1, keepdims=True) + 1e-6)
    assert y.shape == x.shape and y.dtype == x.dtype
    assert jnp.allclose(y, ref, atol=2e-5, rtol=2e-5), "mismatch vs reference (folded path)"

    # Wider last dim exercises the direct (unfolded) reduction path.
    x2 = jax.random.normal(k2, (4, 8, 256), dtype=jnp.float32)
    y2 = jax.block_until_ready(dense_norm(x2, eps=1e-6))
    ref2 = x2 * jax.lax.rsqrt(jnp.mean(x2 * x2, axis=-1, keepdims=True) + 1e-6)
    assert y2.shape == x2.shape and y2.dtype == x2.dtype
    assert jnp.allclose(y2, ref2, atol=2e-5, rtol=2e-5), "mismatch vs reference (wide path)"

    print("KERNEL_OK")
</pallas_src>

<mosaic_0001>
module attributes {stable_mosaic.version = 11 : i64} {
  func.func @_densenorm_folded_kernel(%arg0: i32, %arg1: memref<16x128xf32, #tpu.memory_space<vmem>>, %arg2: memref<128x128xbf16, #tpu.memory_space<vmem>>, %arg3: memref<16x128xf32, #tpu.memory_space<vmem>>) attributes {dimension_semantics = [#tpu.dimension_semantics<parallel>], iteration_bounds = array<i64: 1>, scalar_prefetch = 0 : i64, scratch_operands = 0 : i64, tpu.core_type = #tpu.core_type<tc>, window_params = [{transform_indices = @transform_0, window_bounds = array<i64: 16, 128>}, {pipeline_mode = #tpu.pipeline_mode<synchronous>, transform_indices = @transform_1, window_bounds = array<i64: 128, 128>}, {transform_indices = @transform_2, window_bounds = array<i64: 16, 128>}]} {
    %c0 = arith.constant 0 : index
    %c0_0 = arith.constant 0 : index
    %0 = vector.load %arg1[%c0, %c0_0] : memref<16x128xf32, #tpu.memory_space<vmem>>, vector<16x128xf32>
    %1 = arith.mulf %0, %0 : vector<16x128xf32>
    %2 = arith.truncf %1 : vector<16x128xf32> to vector<16x128xbf16>
    %3 = arith.extf %2 : vector<16x128xbf16> to vector<16x128xf32>
    %4 = arith.subf %1, %3 : vector<16x128xf32>
    %5 = arith.truncf %4 : vector<16x128xf32> to vector<16x128xbf16>
    %c0_1 = arith.constant 0 : index
    %c0_2 = arith.constant 0 : index
    %6 = vector.load %arg2[%c0_1, %c0_2] : memref<128x128xbf16, #tpu.memory_space<vmem>>, vector<128x128xbf16>
    %cst = arith.constant dense<0.000000e+00> : vector<16x128xf32>
    %7 = tpu.matmul %2, %6, %cst {dimension_numbers = #tpu.dot_dimension_numbers<[1], [0], [0], [1], [0, 0, 1, 1], [], []>} : vector<16x128xbf16>, vector<128x128xbf16>, vector<16x128xf32> -> vector<16x128xf32>
    %cst_3 = arith.constant dense<0.000000e+00> : vector<16x128xf32>
    %8 = tpu.matmul %5, %6, %cst_3 {dimension_numbers = #tpu.dot_dimension_numbers<[1], [0], [0], [1], [0, 0, 1, 1], [], []>} : vector<16x128xbf16>, vector<128x128xbf16>, vector<16x128xf32> -> vector<16x128xf32>
    %9 = arith.addf %7, %8 : vector<16x128xf32>
    %cst_4 = arith.constant 6.250000e-02 : f32
    %10 = vector.broadcast %cst_4 : f32 to vector<16x128xf32>
    %11 = arith.mulf %9, %10 : vector<16x128xf32>
    %cst_5 = arith.constant 9.99999997E-7 : f32
    %12 = vector.broadcast %cst_5 : f32 to vector<16x128xf32>
    %13 = arith.addf %11, %12 : vector<16x128xf32>
    %14 = math.rsqrt %13 : vector<16x128xf32>
    %c0_6 = arith.constant 0 : index
    %c0_7 = arith.constant 0 : index
    %15 = vector.load %arg1[%c0_6, %c0_7] : memref<16x128xf32, #tpu.memory_space<vmem>>, vector<16x128xf32>
    %16 = arith.mulf %15, %14 : vector<16x128xf32>
    %c0_8 = arith.constant 0 : index
    %c0_9 = arith.constant 0 : index
    %17 = vector.load %arg3[%c0_8, %c0_9] : memref<16x128xf32, #tpu.memory_space<vmem>>, vector<16x128xf32>
    tpu.vector_store %arg3[%c0_8, %c0_9], %16 {strides = array<i32>} : memref<16x128xf32, #tpu.memory_space<vmem>>, vector<16x128xf32>,
    return
  }
  func.func @transform_0(%arg0: i32) -> (i32, i32) {
    %c0_i32 = arith.constant 0 : i32
    %c0_i32_0 = arith.constant 0 : i32
    return %arg0, %c0_i32 : i32, i32
  }
  func.func @transform_1(%arg0: i32) -> (i32, i32) {
    %c0_i32 = arith.constant 0 : i32
    %c0_i32_0 = arith.constant 0 : i32
    %c0_i32_1 = arith.constant 0 : i32
    return %c0_i32, %c0_i32_0 : i32, i32
  }
  func.func @transform_2(%arg0: i32) -> (i32, i32) {
    %c0_i32 = arith.constant 0 : i32
    %c0_i32_0 = arith.constant 0 : i32
    return %arg0, %c0_i32 : i32, i32
  }
}

</mosaic_0001>

<llo_original>
// kernel: tpu_custom_call.1
$region0: #{tpu_custom_call.1}
  #allocation0 [shape = 'u32[]', space=smem, size = 0x4, offset = 0x4, fixed_abs, tag = 'smem constant byte address 0x4 - core index']
  #allocation1 [shape = 'u32[72,128]{1,0:T(1,128)}', space=vmem, size = 0x9000, scoped, tag = 'internal scratch']
  %s0 = inlined_call_operand.hbm [shape: f32[16,128], index: 0, kind: input, shape index: {}]
  %s1 = inlined_call_operand.hbm [shape: bf16[128,128], index: 1, kind: input, shape index: {}]
  %s2 = inlined_call_operand.hbm [shape: f32[16,128], index: 2, kind: output, shape index: {}]
  %s3 = sld [smem:[#allocation0]]
  $region26: #{tpu_custom_call.1} parent=0
    _
  %s5 = ssub.s32 1, %s3
  %s6 = scalar_select 0, %s5, %s3
  $region1: #{tpu_custom_call.1} parent=0
    #allocation2 [shape = 'u8[8192]{0}', space=vmem, size = 0x2000, scoped, tag = 'input window, operand 0, single buffered']
    #allocation3 [shape = 's32[1]{0}', space=sflag, size = 0x4, scoped, tag = 'scoped memory for tpu_custom_call.1']
    #allocation4 [shape = 's32[1]{0}', space=sflag, size = 0x4, scoped, tag = 'scoped memory for tpu_custom_call.1']
    #allocation5 [shape = 'u8[32768]{0}', space=vmem, size = 0x8000, scoped, tag = 'input window, operand 1, single buffered']
    #allocation6 [shape = 's32[1]{0}', space=sflag, size = 0x4, scoped, tag = 'scoped memory for tpu_custom_call.1']
    #allocation7 [shape = 'u8[8192]{0}', space=vmem, size = 0x2000, scoped, tag = 'output window, operand 0, single buffered']
    %7 = vsyncpa [#allocation3], 0
    %8 = vsyncpa [#allocation6], 0
    %9 = vsyncpa [#allocation4], 0
    // Predicated region
    $region2: #{tpu_custom_call.1} parent=1 // pred_check
      _
    $region3: #{tpu_custom_call.1} parent=1 // pred_check_branch
      %11 = sbr.rel (0) target = $region5
    $region4: #{tpu_custom_call.1} parent=1 // pred_region
      %13 = vsyncadd [#allocation3], 0
      %s14 = sshll.u32 %s0, 4
      %s15 = int_to_ptr.hbm [resolvable:$true] %s14
      %s16 = sshll.u32 [#allocation2], 4
      %s17 = int_to_ptr.vmem [resolvable:$true] %s16
      %22 = dma.hbm_to_vmem [thread:$0]  %s15, 256, %s17, [#allocation3], 128, 128, 8
    $region5: #{tpu_custom_call.1} parent=1 // pred_fallthru
      _
    // Predicated region
    $region6: #{tpu_custom_call.1} parent=1 // pred_check
      _
    $region7: #{tpu_custom_call.1} parent=1 // pred_check_branch
      %24 = sbr.rel (0) target = $region9
    $region8: #{tpu_custom_call.1} parent=1 // pred_region
      %26 = vsyncadd [#allocation6], 0
      %s27 = sshll.u32 %s1, 4
      %s28 = int_to_ptr.hbm [resolvable:$true] %s27
      %s29 = sshll.u32 [#allocation5], 4
      %s30 = int_to_ptr.vmem [resolvable:$true] %s29
      %35 = dma.hbm_to_vmem [thread:$0]  %s28, 1024, %s30, [#allocation6], 64, 64, 4
    $region9: #{tpu_custom_call.1} parent=1 // pred_fallthru
      _
    // Predicated region
    $region10: #{tpu_custom_call.1} parent=1 // pred_check
      _
    $region11: #{tpu_custom_call.1} parent=1 // pred_check_branch
      %37 = sbr.rel (0) target = $region13
    $region12: #{tpu_custom_call.1} parent=1 // pred_region
      %39 = dma.done [#allocation3], 256
    $region13: #{tpu_custom_call.1} parent=1 // pred_fallthru
      _
    // Predicated region
    $region14: #{tpu_custom_call.1} parent=1 // pred_check
      _
    $region15: #{tpu_custom_call.1} parent=1 // pred_check_branch
      %41 = sbr.rel (0) target = $region17
    $region16: #{tpu_custom_call.1} parent=1 // pred_region
      %43 = dma.done [#allocation6], 1024
    $region17: #{tpu_custom_call.1} parent=1 // pred_fallthru
      _
    %v44 = vld [vmem:[#allocation2] sm:$0xff]
    %v45 = vld [vmem:[#allocation2 + $0x8] sm:$0xff]
    %v46 = vmul.f32 %v44, %v44
    %v47 = vmul.f32 %v45, %v45
    %v48 = vpack.c.bf16 %v46, %v46
    %v49 = vpack.c.bf16 %v47, %v47
    %v50 = vunpack.c.l.bf16 %v48
    %v51 = vunpack.c.l.bf16 %v49
    %v52 = vsub.f32 %v46, %v50
    %v53 = vsub.f32 %v47, %v51
    %v54 = vpack.c.bf16 %v53, %v52
    %v55 = vld [vmem:[#allocation5] sm:$0xf]
    %v56 = vld [vmem:[#allocation5 + $0x4] sm:$0xf]
    %v57 = vld [vmem:[#allocation5 + $0x8] sm:$0xf]
    %v58 = vld [vmem:[#allocation5 + $0xc] sm:$0xf]
    %v59 = vld [vmem:[#allocation5 + $0x10] sm:$0xf]
    %v60 = vld [vmem:[#allocation5 + $0x14] sm:$0xf]
    %v61 = vld [vmem:[#allocation5 + $0x18] sm:$0xf]
    %v62 = vld [vmem:[#allocation5 + $0x1c] sm:$0xf]
    %v63 = vld [vmem:[#allocation5 + $0x20] sm:$0xf]
    %v64 = vld [vmem:[#allocation5 + $0x24] sm:$0xf]
    %v65 = vld [vmem:[#allocation5 + $0x28] sm:$0xf]
    %v66 = vld [vmem:[#allocation5 + $0x2c] sm:$0xf]
    %v67 = vld [vmem:[#allocation5 + $0x30] sm:$0xf]
    %v68 = vld [vmem:[#allocation5 + $0x34] sm:$0xf]
    %v69 = vld [vmem:[#allocation5 + $0x38] sm:$0xf]
    %v70 = vld [vmem:[#allocation5 + $0x3c] sm:$0xf]
    %v87 = vunpack.c.l.b16 %v55
    %v88 = vunpack.c.l.b16 %v56
    %v89 = vunpack.c.l.b16 %v57
    %v90 = vunpack.c.l.b16 %v58
    %v91 = vunpack.c.l.b16 %v59
    %v92 = vunpack.c.l.b16 %v60
    %v93 = vunpack.c.l.b16 %v61
    %v94 = vunpack.c.l.b16 %v62
    %v95 = vunpack.c.l.b16 %v63
    %v96 = vunpack.c.l.b16 %v64
    %v97 = vunpack.c.l.b16 %v65
    %v98 = vunpack.c.l.b16 %v66
    %v99 = vunpack.c.l.b16 %v67
    %v100 = vunpack.c.l.b16 %v68
    %v101 = vunpack.c.l.b16 %v69
    %v102 = vunpack.c.l.b16 %v70
    %v103 = vpack.c.b16 %v88, %v87
    %v104 = vpack.c.b16 %v90, %v89
    %v105 = vpack.c.b16 %v92, %v91
    %v106 = vpack.c.b16 %v94, %v93
    %v107 = vpack.c.b16 %v96, %v95
    %v108 = vpack.c.b16 %v98, %v97
    %v109 = vpack.c.b16 %v100, %v99
    %v110 = vpack.c.b16 %v102, %v101
    %119 = vmatpush.bf16.msra.mxu0 %v110
    %120 = vmatpush.bf16.msra.mxu0 %v109
    %121 = vmatpush.bf16.msra.mxu0 %v108
    %122 = vmatpush.bf16.msra.mxu0 %v107
    %123 = vmatpush.bf16.msra.mxu0 %v106
    %124 = vmatpush.bf16.msra.mxu0 %v105
    %125 = vmatpush.bf16.msra.mxu0 %v104
    %126 = vmatpush.bf16.msra.mxu0 %v103
    %127 = vmatmul.bf16.gmra.mxu0 %v54
    %v128 = vpop.f32.mrf.mxu0
    %v129 = vadd.f32 0.0, %v128
    %v130 = vpop.f32.mrf.mxu0
    %v131 = vadd.f32 0.0, %v130
    %132 = vdwg.mxu0
    %v135 = vunpack.c.l.b16 %v48
    %v136 = vunpack.c.l.b16 %v49
    %v137 = vpack.c.b16 %v136, %v135
    %139 = vmatpush.bf16.msra.mxu0 %v110
    %140 = vmatpush.bf16.msra.mxu0 %v109
    %141 = vmatpush.bf16.msra.mxu0 %v108
    %142 = vmatpush.bf16.msra.mxu0 %v107
    %143 = vmatpush.bf16.msra.mxu0 %v106
    %144 = vmatpush.bf16.msra.mxu0 %v105
    %145 = vmatpush.bf16.msra.mxu0 %v104
    %146 = vmatpush.bf16.msra.mxu0 %v103
    %147 = vmatmul.bf16.gmra.mxu0 %v137
    %v148 = vpop.f32.mrf.mxu0
    %v149 = vadd.f32 %v129, %v148
    %v150 = vpop.f32.mrf.mxu0
    %v151 = vadd.f32 %v131, %v150
    %152 = vdwg.mxu0
    %v153 = vmul.f32 %v149, 0.0625
    %v154 = vmul.f32 %v151, 0.0625
    %v155 = vadd.f32 %v153, 1e-06
    %v156 = vadd.f32 %v154, 1e-06
    %v157 = vrsqrt.pop %v155
    %v158 = vmul.f32 %v157, %v155
    %v159 = vmul.f32 %v158, %v157
    %v160 = vmul.f32 0.5, %v159
    %v161 = vsub.f32 1.5, %v160
    %v162 = vmul.f32 %v157, %v161
    %vm163 = vweird.f32 %v155
    %vm164 = vweird.f32 %v157
    %vm165 = vmor %vm163, %vm164
    %v166 = vsel %vm165, %v157, %v162
    %v167 = vrsqrt.pop %v156
    %v168 = vmul.f32 %v167, %v156
    %v169 = vmul.f32 %v168, %v167
    %v170 = vmul.f32 0.5, %v169
    %v171 = vsub.f32 1.5, %v170
    %v172 = vmul.f32 %v167, %v171
    %vm173 = vweird.f32 %v156
    %vm174 = vweird.f32 %v167
    %vm175 = vmor %vm173, %vm174
    %v176 = vsel %vm175, %v167, %v172
    %v177 = vmul.f32 %v44, %v166
    %v178 = vmul.f32 %v45, %v176
    %179 = vst [vmem:[#allocation7] sm:$0xff] %v177
    %180 = vst [vmem:[#allocation7 + $0x8] sm:$0xff] %v178
    // Predicated region
    $region18: #{tpu_custom_call.1} parent=1 // pred_check
      _
    $region19: #{tpu_custom_call.1} parent=1 // pred_check_branch
      %182 = sbr.rel (0) target = $region21
    $region20: #{tpu_custom_call.1} parent=1 // pred_region
      %184 = vsyncadd [#allocation4], 0
      %s185 = sshll.u32 [#allocation7], 4
      %s186 = int_to_ptr.vmem [resolvable:$true] %s185
      %s187 = sshll.u32 %s2, 4
      %s188 = int_to_ptr.hbm [resolvable:$true] %s187
      %193 = dma.vmem_to_hbm [thread:$0]  %s186, 256, %s188, [#allocation4], 128, 128, 8
    $region21: #{tpu_custom_call.1} parent=1 // pred_fallthru
      _
    // Predicated region
    $region22: #{tpu_custom_call.1} parent=1 // pred_check
      _
    $region23: #{tpu_custom_call.1} parent=1 // pred_check_branch
      %195 = sbr.rel (0) target = $region25
    $region24: #{tpu_custom_call.1} parent=1 // pred_region
      %197 = dma.done [#allocation4], 256
    $region25: #{tpu_custom_call.1} parent=1 // pred_fallthru
      _
    %198 = vsyncpa [#allocation3], 1
    %199 = vsyncpa [#allocation6], 1
    %200 = vsyncpa [#allocation4], 1

</llo_original>
